<compile_context>
chip_gen: v5e
topology: v5e:2x2
jax: 0.10.0
libtpu: 0.0.40
codegen_flags: <defaults>
</compile_context>

<pallas_src>
import functools

import jax
import jax.numpy as jnp
from jax.experimental import pallas as pl
from jax.experimental.pallas import tpu as pltpu


def _round_up(n, m):
    return ((n + m - 1) // m) * m


def _vmem_capacity_bytes():
    # Trace-time hardware query; fall back to the v7x floor (64 MiB) if unavailable.
    try:
        return int(pltpu.get_tpu_info().vmem_capacity_bytes)
    except Exception:
        return 64 << 20


# ---------------------------------------------------------------------------
# Kernels
# ---------------------------------------------------------------------------

def mlp_kernel_resident(x_ref, w1_ref, b1_ref, w2_ref, b2_ref, o_ref):
    """Both weight matrices are VMEM-resident; 1-D grid over batch tiles."""
    # linear1 on the MXU: bf16 inputs, f32 accumulation.
    h = jnp.dot(x_ref[...], w1_ref[...], preferred_element_type=jnp.float32)
    # Bias + ReLU in f32 on the VPU, then cast straight to bf16: halves the
    # intermediate footprint and feeds the second MXU matmul directly.
    h = jnp.maximum(h + b1_ref[...], 0.0).astype(w2_ref.dtype)
    out = jnp.dot(h, w2_ref[...], preferred_element_type=jnp.float32)
    o_ref[...] = (out + b2_ref[...]).astype(o_ref.dtype)


def mlp_kernel_hblocked(x_ref, w1_ref, b1_ref, w2_ref, b2_ref, o_ref, acc_ref):
    """Fallback for weights too large to keep fully VMEM-resident (v7x 64 MiB).

    Grid = (batch tiles, hidden blocks); the hidden axis is a reduction
    ("arbitrary"), accumulated in an f32 scratch. ReLU per hidden block is exact
    because each hidden unit is independent.
    """
    h_idx = pl.program_id(1)

    @pl.when(h_idx == 0)
    def _():
        acc_ref[...] = jnp.zeros_like(acc_ref)

    a = jnp.dot(x_ref[...], w1_ref[...], preferred_element_type=jnp.float32)
    a = jnp.maximum(a + b1_ref[...], 0.0).astype(w2_ref.dtype)
    acc_ref[...] += jnp.dot(a, w2_ref[...], preferred_element_type=jnp.float32)

    @pl.when(h_idx == pl.num_programs(1) - 1)
    def _():
        o_ref[...] = (acc_ref[...] + b2_ref[...]).astype(o_ref.dtype)


# ---------------------------------------------------------------------------
# Forward
# ---------------------------------------------------------------------------

@functools.partial(jax.jit, static_argnames=("out_dim", "tile_b", "out_dtype"))
def mlp_forward(x, w1p, b1p, w2p, b2p, *, out_dim, tile_b=None,
                out_dtype=jnp.float32):
    """Forward pass of Linear -> ReLU -> Linear on prepared (padded) params.

    x:   [B, in]         float (cast to bf16 for the MXU)
    w1p: [in_p, hid_p]   bf16, pre-transposed + pre-padded (one-time)
    b1p: [1, hid_p]      f32,  pre-padded
    w2p: [hid_p, out_p]  bf16, pre-transposed + pre-padded
    b2p: [1, out_p]      f32,  pre-padded
    """
    B, in_dim = x.shape
    in_p, hid_p = w1p.shape
    out_p = w2p.shape[1]
    out_size = jnp.dtype(out_dtype).itemsize

    cap = _vmem_capacity_bytes()

    # Resident weights/biases are single-buffered (pl.Buffered(1) below).
    weights_vmem = w1p.size * 2 + w2p.size * 2 + b1p.size * 4 + b2p.size * 4
    resident = weights_vmem <= min(40 << 20, cap // 2)

    # --- batch-tile selection: balanced, multiple of 8, >=2 grid steps if B>8 ---
    if tile_b is None:
        tile_b_max = 1024 if cap >= (100 << 20) else 512   # v5e/v6e vs v7x budgets
    else:
        tile_b_max = max(8, _round_up(int(tile_b), 8))     # enforce the (8,128) rule
    n_tiles = max(1, pl.cdiv(B, tile_b_max))
    if n_tiles < 2 and B > 8:
        n_tiles = 2                                        # keep both v7x TCs busy
    tb = _round_up(pl.cdiv(B, n_tiles), 8)

    # Shrink the tile if its working set would blow the per-chip VMEM budget.
    row_bytes = 2 * in_p * 2 + 2 * out_p * out_size + hid_p * (4 + 2) + out_p * 4
    if resident:
        fixed_bytes = weights_vmem
    else:
        fixed_bytes = 2 * 2 * (in_p + out_p) * 512 + (512 + out_p) * 4
    while tb > 8 and fixed_bytes + tb * row_bytes > int(cap * 0.7):
        tb = _round_up(pl.cdiv(tb, 2), 8)

    b_p = _round_up(B, tb)
    grid_b = b_p // tb

    # --- conditional activation pad (skipped entirely for aligned shapes) ---
    x_b = x.astype(jnp.bfloat16)
    if b_p != B or in_p != in_dim:
        # For chronically misaligned in_dim a production path would pad the x tile
        # inside the kernel instead of in HBM; the wrapper pad keeps this simple.
        x_b = jnp.pad(x_b, ((0, b_p - B), (0, in_p - in_dim)))

    cost = pl.CostEstimate(
        flops=2 * b_p * (in_p * hid_p + hid_p * out_p),
        transcendentals=0,
        bytes_accessed=(b_p * in_p * 2 + w1p.size * 2 + w2p.size * 2
                        + b1p.size * 4 + b2p.size * 4 + b_p * out_p * out_size),
    )

    if resident:
        vmem_bytes = (weights_vmem
                      + 2 * tb * in_p * 2            # double-buffered bf16 x tiles
                      + 2 * tb * out_p * out_size    # double-buffered out tiles
                      + tb * hid_p * (4 + 2))        # f32 matmul result + bf16 h
        vmem_limit = max(16 << 20,
                         min(int(vmem_bytes * 1.5) + (4 << 20), int(cap * 0.8)))
        out_padded = pl.pallas_call(
            mlp_kernel_resident,
            out_shape=jax.ShapeDtypeStruct((b_p, out_p), out_dtype),
            grid_spec=pltpu.PrefetchScalarGridSpec(
                num_scalar_prefetch=0,
                grid=(grid_b,),
                in_specs=[
                    # x: batch-tiled, auto double-buffered.
                    pl.BlockSpec((tb, in_p), lambda i: (i, 0)),
                    # Weights/biases: constant index_map -> VMEM-resident;
                    # single buffer so they don't cost 2x VMEM.
                    pl.BlockSpec((in_p, hid_p), lambda i: (0, 0),
                                 pipeline_mode=pl.Buffered(1)),
                    pl.BlockSpec((1, hid_p), lambda i: (0, 0),
                                 pipeline_mode=pl.Buffered(1)),
                    pl.BlockSpec((hid_p, out_p), lambda i: (0, 0),
                                 pipeline_mode=pl.Buffered(1)),
                    pl.BlockSpec((1, out_p), lambda i: (0, 0),
                                 pipeline_mode=pl.Buffered(1)),
                ],
                out_specs=pl.BlockSpec((tb, out_p), lambda i: (i, 0)),
            ),
            compiler_params=pltpu.CompilerParams(
                dimension_semantics=("parallel",),
                vmem_limit_bytes=vmem_limit,
            ),
            cost_estimate=cost,
        )(x_b, w1p, b1p, w2p, b2p)
    else:
        # Hidden-blocked fallback: stream w1 columns / w2 rows, accumulate in f32.
        tile_h = 512 if hid_p % 512 == 0 else (256 if hid_p % 256 == 0 else 128)
        grid_h = hid_p // tile_h
        vmem_bytes = (2 * (in_p * tile_h + tile_h * out_p) * 2 + 2 * tile_h * 4
                      + out_p * 4
                      + 2 * tb * in_p * 2 + 2 * tb * out_p * out_size
                      + tb * out_p * 4 + tb * tile_h * (4 + 2))
        vmem_limit = max(16 << 20,
                         min(int(vmem_bytes * 1.5) + (4 << 20), int(cap * 0.8)))
        out_padded = pl.pallas_call(
            mlp_kernel_hblocked,
            out_shape=jax.ShapeDtypeStruct((b_p, out_p), out_dtype),
            grid_spec=pltpu.PrefetchScalarGridSpec(
                num_scalar_prefetch=0,
                grid=(grid_b, grid_h),
                in_specs=[
                    pl.BlockSpec((tb, in_p), lambda i, h: (i, 0)),
                    pl.BlockSpec((in_p, tile_h), lambda i, h: (0, h)),
                    pl.BlockSpec((1, tile_h), lambda i, h: (0, h)),
                    pl.BlockSpec((tile_h, out_p), lambda i, h: (h, 0)),
                    pl.BlockSpec((1, out_p), lambda i, h: (0, 0),
                                 pipeline_mode=pl.Buffered(1)),
                ],
                out_specs=pl.BlockSpec((tb, out_p), lambda i, h: (i, 0)),
                scratch_shapes=[pltpu.VMEM((tb, out_p), jnp.float32)],
            ),
            compiler_params=pltpu.CompilerParams(
                dimension_semantics=("parallel", "arbitrary"),
                vmem_limit_bytes=vmem_limit,
            ),
            cost_estimate=cost,
        )(x_b, w1p, b1p, w2p, b2p)

    # Conditional slice: only pay the extra HBM roundtrip if padding was added.
    if b_p != B or out_p != out_dim:
        out_padded = out_padded[:B, :out_dim]
    return out_padded


# ---------------------------------------------------------------------------
# Parameter init / one-time preparation
# ---------------------------------------------------------------------------

def init_linear_params(key, in_features, out_features):
    """PyTorch nn.Linear default init: U[-1/sqrt(fan_in), +1/sqrt(fan_in)],
    returned in torch layout (weight [out, in], bias [out])."""
    kw, kb = jax.random.split(key)
    bound = 1.0 / jnp.sqrt(jnp.float32(in_features))
    w = jax.random.uniform(kw, (out_features, in_features), jnp.float32, -bound, bound)
    b = jax.random.uniform(kb, (out_features,), jnp.float32, -bound, bound)
    return w, b


def prepare_mlp_params(w1, b1, w2, b2):
    """ONE-TIME prep: transpose to [in, out], cast weights to bf16, pad feature
    dims to lane multiples (128), reshape biases to (1, N).  The forward path
    consumes these directly, so no per-call weight pads/casts/transposes hit HBM.
    Zero-padding is semantics-preserving: padded inputs/weights/bias are zero
    (ReLU(0)=0) and padded output columns are sliced off in the forward."""
    hidden, in_dim = w1.shape
    out_dim = w2.shape[0]
    in_p = _round_up(in_dim, 128)
    hid_p = _round_up(hidden, 128)
    out_p = _round_up(out_dim, 128)
    w1p = jnp.pad(jnp.transpose(w1).astype(jnp.bfloat16),
                  ((0, in_p - in_dim), (0, hid_p - hidden)))
    w2p = jnp.pad(jnp.transpose(w2).astype(jnp.bfloat16),
                  ((0, hid_p - hidden), (0, out_p - out_dim)))
    b1p = jnp.pad(b1.astype(jnp.float32), (0, hid_p - hidden)).reshape(1, hid_p)
    b2p = jnp.pad(b2.astype(jnp.float32), (0, out_p - out_dim)).reshape(1, out_p)
    return w1p, b1p, w2p, b2p


if __name__ == "__main__":
    # Small shapes consistent with the module: Linear(in) -> ReLU -> Linear(out).
    batch, input_dim, hidden_size, output_dim = 16, 16, 32, 8

    key = jax.random.PRNGKey(0)
    kx, k1, k2 = jax.random.split(key, 3)

    x = jax.random.normal(kx, (batch, input_dim), jnp.float32)
    w1, b1 = init_linear_params(k1, input_dim, hidden_size)
    w2, b2 = init_linear_params(k2, hidden_size, output_dim)

    # One-time parameter prep (transpose / bf16 cast / pad) outside the forward path.
    w1p, b1p, w2p, b2p = jax.block_until_ready(prepare_mlp_params(w1, b1, w2, b2))

    out = mlp_forward(x, w1p, b1p, w2p, b2p, out_dim=output_dim)
    out = jax.block_until_ready(out)

    # Pure-JAX reference with the same bf16-input / f32-accumulate math.
    h_ref = jnp.maximum(
        jnp.dot(x.astype(jnp.bfloat16), jnp.transpose(w1).astype(jnp.bfloat16),
                preferred_element_type=jnp.float32) + b1, 0.0)
    ref = jnp.dot(h_ref.astype(jnp.bfloat16), jnp.transpose(w2).astype(jnp.bfloat16),
                  preferred_element_type=jnp.float32) + b2

    assert out.shape == (batch, output_dim)
    max_err = float(jnp.max(jnp.abs(out - ref)))
    assert jnp.allclose(out, ref, atol=1e-2, rtol=1e-2), max_err

    print("KERNEL_OK")
</pallas_src>

<mosaic_0001>
module attributes {stable_mosaic.version = 11 : i64} {
  func.func @mlp_kernel_resident(%arg0: i32, %arg1: memref<8x128xbf16, #tpu.memory_space<vmem>>, %arg2: memref<128x128xbf16, #tpu.memory_space<vmem>>, %arg3: memref<1x128xf32, #tpu.memory_space<vmem>>, %arg4: memref<128x128xbf16, #tpu.memory_space<vmem>>, %arg5: memref<1x128xf32, #tpu.memory_space<vmem>>, %arg6: memref<8x128xf32, #tpu.memory_space<vmem>>) attributes {dimension_semantics = [#tpu.dimension_semantics<parallel>], iteration_bounds = array<i64: 2>, scalar_prefetch = 0 : i64, scratch_operands = 0 : i64, tpu.core_type = #tpu.core_type<tc>, window_params = [{transform_indices = @transform_0, window_bounds = array<i64: 8, 128>}, {pipeline_mode = #tpu.pipeline_mode<synchronous>, transform_indices = @transform_1, window_bounds = array<i64: 128, 128>}, {pipeline_mode = #tpu.pipeline_mode<synchronous>, transform_indices = @transform_2, window_bounds = array<i64: 1, 128>}, {pipeline_mode = #tpu.pipeline_mode<synchronous>, transform_indices = @transform_3, window_bounds = array<i64: 128, 128>}, {pipeline_mode = #tpu.pipeline_mode<synchronous>, transform_indices = @transform_4, window_bounds = array<i64: 1, 128>}, {transform_indices = @transform_5, window_bounds = array<i64: 8, 128>}]} {
    %c0 = arith.constant 0 : index
    %c0_0 = arith.constant 0 : index
    %0 = vector.load %arg1[%c0, %c0_0] : memref<8x128xbf16, #tpu.memory_space<vmem>>, vector<8x128xbf16>
    %c0_1 = arith.constant 0 : index
    %c0_2 = arith.constant 0 : index
    %1 = vector.load %arg2[%c0_1, %c0_2] : memref<128x128xbf16, #tpu.memory_space<vmem>>, vector<128x128xbf16>
    %cst = arith.constant dense<0.000000e+00> : vector<8x128xf32>
    %2 = tpu.matmul %0, %1, %cst {dimension_numbers = #tpu.dot_dimension_numbers<[1], [0], [0], [1], [0, 0, 1, 1], [], []>} : vector<8x128xbf16>, vector<128x128xbf16>, vector<8x128xf32> -> vector<8x128xf32>
    %c0_3 = arith.constant 0 : index
    %c0_4 = arith.constant 0 : index
    %3 = vector.load %arg3[%c0_3, %c0_4] : memref<1x128xf32, #tpu.memory_space<vmem>>, vector<1x128xf32>
    %4 = vector.broadcast %3 : vector<1x128xf32> to vector<8x128xf32>
    %5 = arith.addf %2, %4 : vector<8x128xf32>
    %cst_5 = arith.constant 0.000000e+00 : f32
    %6 = vector.broadcast %cst_5 : f32 to vector<8x128xf32>
    %7 = arith.maximumf %5, %6 : vector<8x128xf32>
    %8 = arith.truncf %7 : vector<8x128xf32> to vector<8x128xbf16>
    %c0_6 = arith.constant 0 : index
    %c0_7 = arith.constant 0 : index
    %9 = vector.load %arg4[%c0_6, %c0_7] : memref<128x128xbf16, #tpu.memory_space<vmem>>, vector<128x128xbf16>
    %cst_8 = arith.constant dense<0.000000e+00> : vector<8x128xf32>
    %10 = tpu.matmul %8, %9, %cst_8 {dimension_numbers = #tpu.dot_dimension_numbers<[1], [0], [0], [1], [0, 0, 1, 1], [], []>} : vector<8x128xbf16>, vector<128x128xbf16>, vector<8x128xf32> -> vector<8x128xf32>
    %c0_9 = arith.constant 0 : index
    %c0_10 = arith.constant 0 : index
    %11 = vector.load %arg5[%c0_9, %c0_10] : memref<1x128xf32, #tpu.memory_space<vmem>>, vector<1x128xf32>
    %12 = vector.broadcast %11 : vector<1x128xf32> to vector<8x128xf32>
    %13 = arith.addf %10, %12 : vector<8x128xf32>
    %c0_11 = arith.constant 0 : index
    %c0_12 = arith.constant 0 : index
    %14 = vector.load %arg6[%c0_11, %c0_12] : memref<8x128xf32, #tpu.memory_space<vmem>>, vector<8x128xf32>
    tpu.vector_store %arg6[%c0_11, %c0_12], %13 {strides = array<i32>} : memref<8x128xf32, #tpu.memory_space<vmem>>, vector<8x128xf32>,
    return
  }
  func.func @transform_0(%arg0: i32) -> (i32, i32) {
    %c0_i32 = arith.constant 0 : i32
    %c0_i32_0 = arith.constant 0 : i32
    return %arg0, %c0_i32 : i32, i32
  }
  func.func @transform_1(%arg0: i32) -> (i32, i32) {
    %c0_i32 = arith.constant 0 : i32
    %c0_i32_0 = arith.constant 0 : i32
    %c0_i32_1 = arith.constant 0 : i32
    return %c0_i32, %c0_i32_0 : i32, i32
  }
  func.func @transform_2(%arg0: i32) -> (i32, i32) {
    %c0_i32 = arith.constant 0 : i32
    %c0_i32_0 = arith.constant 0 : i32
    %c0_i32_1 = arith.constant 0 : i32
    return %c0_i32, %c0_i32_0 : i32, i32
  }
  func.func @transform_3(%arg0: i32) -> (i32, i32) {
    %c0_i32 = arith.constant 0 : i32
    %c0_i32_0 = arith.constant 0 : i32
    %c0_i32_1 = arith.constant 0 : i32
    return %c0_i32, %c0_i32_0 : i32, i32
  }
  func.func @transform_4(%arg0: i32) -> (i32, i32) {
    %c0_i32 = arith.constant 0 : i32
    %c0_i32_0 = arith.constant 0 : i32
    %c0_i32_1 = arith.constant 0 : i32
    return %c0_i32, %c0_i32_0 : i32, i32
  }
  func.func @transform_5(%arg0: i32) -> (i32, i32) {
    %c0_i32 = arith.constant 0 : i32
    %c0_i32_0 = arith.constant 0 : i32
    return %arg0, %c0_i32 : i32, i32
  }
}

</mosaic_0001>

<llo_original>
// kernel: mlp_forward.1
$region0: #{mlp_forward.1}
  #allocation0 [shape = 'u32[]', space=smem, size = 0x4, offset = 0x4, fixed_abs, tag = 'smem constant byte address 0x4 - core index']
  #allocation1 [shape = 'u32[72,128]{1,0:T(1,128)}', space=vmem, size = 0x9000, scoped, tag = 'internal scratch']
  %s0 = inlined_call_operand.vmem [shape: bf16[16,128], index: 0, kind: input, shape index: {}]
  %s1 = inlined_call_operand.hbm [shape: bf16[128,128], index: 1, kind: input, shape index: {}]
  %s2 = inlined_call_operand.vmem [shape: f32[1,128], index: 2, kind: input, shape index: {}]
  %s3 = inlined_call_operand.hbm [shape: bf16[128,128], index: 3, kind: input, shape index: {}]
  %s4 = inlined_call_operand.vmem [shape: f32[1,128], index: 4, kind: input, shape index: {}]
  %s5 = inlined_call_operand.vmem [shape: f32[16,128], index: 5, kind: output, shape index: {}]
  %s6 = sld [smem:[#allocation0]]
  $region61: #{mlp_forward.1} parent=0
    _
  %s8 = ssub.s32 1, %s6
  %s9 = scalar_select 0, %s8, %s6
  $region1: #{mlp_forward.1} parent=0
    #allocation2 [shape = 'u8[32768]{0}', space=vmem, size = 0x8000, scoped, tag = 'input window, operand 1, single buffered']
    #allocation3 [shape = 's32[2]{0}', space=sflag, size = 0x8, scoped, tag = 'scoped memory for mlp_forward.1']
    #allocation4 [shape = 'u8[32768]{0}', space=vmem, size = 0x8000, scoped, tag = 'input window, operand 3, single buffered']
    #allocation5 [shape = 's32[1]{0}', space=sflag, size = 0x4, scoped, tag = 'scoped memory for mlp_forward.1']
    %10 = vsyncpa [#allocation3], 0
    %11 = vsyncpa [#allocation5], 0
    loop: start=0, step=1, limit=4
    $region2: #{mlp_forward.1} parent=1 // loop_pre_header
      _
    $region3: #{mlp_forward.1} parent=1 // loop_header
      %s13 = sphi 0, %s17
      %p14 = scmp.ge.s32.totalorder %s13, 4
      %s23 = sphi 0, %s25
      %s26 = sphi 0, %s23
      %s27 = sphi 0, %s26
      %s43 = sphi 0, %s27
      %s47 = sphi 0, %s47
      %s49 = sphi 0, %s47
      %s50 = sphi 0, %s49
      %s64 = sphi 0, %s50
      %s68 = sphi 0, %s68
      %s70 = sphi 0, %s68
      %s71 = sphi 0, %s70
      %s85 = sphi 0, %s71
      %s89 = sphi 0, %s89
      %s91 = sphi 0, %s89
      %s92 = sphi 0, %s91
      %s106 = sphi 0, %s92
      %s110 = sphi 0, %s110
      %s112 = sphi 0, %s110
      %s113 = sphi 0, %s112
      %s127 = sphi 0, %s113
      %s133 = sphi 0, %s135
      %s136 = sphi 0, %s133
      %s137 = sphi 0, %s136
      %s153 = sphi 0, %s137
    $region4: #{mlp_forward.1} parent=1 // loop_header_branch
      %16 = sbr.rel (%p14) target = $region8
    $region5: #{mlp_forward.1} parent=1 // loop_body
      %s18 = ssub.s32 %s13, 1
      %s19 = ssub.s32 %s13, 2
      %s20 = sadd.s32 %s13, 1
      %s21 = ssub.s32 %s13, %s20
      %p22 = scmp.eq.s32.totalorder %s21, 0
      %s24 = sadd.s32 %s23, 1
      %s25 = scalar_select %p22, %s23, %s24
      %p28 = pneg %p22
      %p29 = scmp.eq.s32.totalorder %s13, 1
      %p30 = por %p28, %p29
      %p31 = scmp.ne.s32.totalorder %s23, %s26
      %p32 = scmp.eq.s32.totalorder %s13, 0
      %p33 = por %p31, %p32
      %p34 = scmp.ne.s32.totalorder %s23, %s26
      %p35 = scmp.eq.s32.totalorder %s18, 1
      %p36 = por %p34, %p35
      %p37 = scmp.ne.s32.totalorder %s26, %s27
      %p38 = scmp.eq.s32.totalorder %s18, 0
      %p39 = por %p37, %p38
      %p40 = scmp.ne.s32.totalorder %s26, %s27
      %p41 = scmp.eq.s32.totalorder %s19, 1
      %p42 = por %p40, %p41
      %p44 = scmp.ne.s32.totalorder %s27, %s43
      %p45 = scmp.eq.s32.totalorder %s19, 0
      %p46 = por %p44, %p45
      %s48 = sadd.s32 %s47, 1
      %p51 = scmp.eq.s32.totalorder %s13, 1
      %p52 = scmp.ne.s32.totalorder %s47, %s49
      %p53 = scmp.eq.s32.totalorder %s13, 0
      %p54 = por %p52, %p53
      %p55 = scmp.ne.s32.totalorder %s47, %s49
      %p56 = scmp.eq.s32.totalorder %s18, 1
      %p57 = por %p55, %p56
      %p58 = scmp.ne.s32.totalorder %s49, %s50
      %p59 = scmp.eq.s32.totalorder %s18, 0
      %p60 = por %p58, %p59
      %p61 = scmp.ne.s32.totalorder %s49, %s50
      %p62 = scmp.eq.s32.totalorder %s19, 1
      %p63 = por %p61, %p62
      %p65 = scmp.ne.s32.totalorder %s50, %s64
      %p66 = scmp.eq.s32.totalorder %s19, 0
      %p67 = por %p65, %p66
      %s69 = sadd.s32 %s68, 1
      %p72 = scmp.eq.s32.totalorder %s13, 1
      %p73 = scmp.ne.s32.totalorder %s68, %s70
      %p74 = scmp.eq.s32.totalorder %s13, 0
      %p75 = por %p73, %p74
      %p76 = scmp.ne.s32.totalorder %s68, %s70
      %p77 = scmp.eq.s32.totalorder %s18, 1
      %p78 = por %p76, %p77
      %p79 = scmp.ne.s32.totalorder %s70, %s71
      %p80 = scmp.eq.s32.totalorder %s18, 0
      %p81 = por %p79, %p80
      %p82 = scmp.ne.s32.totalorder %s70, %s71
      %p83 = scmp.eq.s32.totalorder %s19, 1
      %p84 = por %p82, %p83
      %p86 = scmp.ne.s32.totalorder %s71, %s85
      %p87 = scmp.eq.s32.totalorder %s19, 0
      %p88 = por %p86, %p87
      %s90 = sadd.s32 %s89, 1
      %p93 = scmp.eq.s32.totalorder %s13, 1
      %p94 = scmp.ne.s32.totalorder %s89, %s91
      %p95 = scmp.eq.s32.totalorder %s13, 0
      %p96 = por %p94, %p95
      %p97 = scmp.ne.s32.totalorder %s89, %s91
      %p98 = scmp.eq.s32.totalorder %s18, 1
      %p99 = por %p97, %p98
      %p100 = scmp.ne.s32.totalorder %s91, %s92
      %p101 = scmp.eq.s32.totalorder %s18, 0
      %p102 = por %p100, %p101
      %p103 = scmp.ne.s32.totalorder %s91, %s92
      %p104 = scmp.eq.s32.totalorder %s19, 1
      %p105 = por %p103, %p104
      %p107 = scmp.ne.s32.totalorder %s92, %s106
      %p108 = scmp.eq.s32.totalorder %s19, 0
      %p109 = por %p107, %p108
      %s111 = sadd.s32 %s110, 1
      %p114 = scmp.eq.s32.totalorder %s13, 1
      %p115 = scmp.ne.s32.totalorder %s110, %s112
      %p116 = scmp.eq.s32.totalorder %s13, 0
      %p117 = por %p115, %p116
      %p118 = scmp.ne.s32.totalorder %s110, %s112
      %p119 = scmp.eq.s32.totalorder %s18, 1
      %p120 = por %p118, %p119
      %p121 = scmp.ne.s32.totalorder %s112, %s113
      %p122 = scmp.eq.s32.totalorder %s18, 0
      %p123 = por %p121, %p122
      %p124 = scmp.ne.s32.totalorder %s112, %s113
      %p125 = scmp.eq.s32.totalorder %s19, 1
      %p126 = por %p124, %p125
      %p128 = scmp.ne.s32.totalorder %s113, %s127
      %p129 = scmp.eq.s32.totalorder %s19, 0
      %p130 = por %p128, %p129
      %s131 = ssub.s32 %s13, %s20
      %p132 = scmp.eq.s32.totalorder %s131, 0
      %s134 = sadd.s32 %s133, 1
      %s135 = scalar_select %p132, %s133, %s134
      %p138 = pneg %p132
      %p139 = scmp.eq.s32.totalorder %s13, 1
      %p140 = por %p138, %p139
      %p141 = scmp.ne.s32.totalorder %s133, %s136
      %p142 = scmp.eq.s32.totalorder %s13, 0
      %p143 = por %p141, %p142
      %p144 = scmp.ne.s32.totalorder %s133, %s136
      %p145 = scmp.eq.s32.totalorder %s18, 1
      %p146 = por %p144, %p145
      %p147 = scmp.ne.s32.totalorder %s136, %s137
      %p148 = scmp.eq.s32.totalorder %s18, 0
      %p149 = por %p147, %p148
      %p150 = scmp.ne.s32.totalorder %s136, %s137
      %p151 = scmp.eq.s32.totalorder %s19, 1
      %p152 = por %p150, %p151
      %p154 = scmp.ne.s32.totalorder %s137, %s153
      %p155 = scmp.eq.s32.totalorder %s19, 0
      %p156 = por %p154, %p155
      %p157 = scmp.le.s32.totalorder 1, %s13
      %p158 = scmp.lt.s32.totalorder %s13, 3
      %p159 = pnand %p157, %p158
      %p160 = pneg %p159
      // Predicated region
      $region9: #{mlp_forward.1} parent=5 // pred_check
        _
      $region10: #{mlp_forward.1} parent=5 // pred_check_branch
        %162 = sbr.rel (%p159) target = $region12
      $region11: #{mlp_forward.1} parent=5 // pred_region
        %s163 = ssub.s32 %s13, 1
        // Predicated region
        $region13: #{mlp_forward.1} parent=11 // pred_check
          %p164 = pneg %p60
        $region14: #{mlp_forward.1} parent=11 // pred_check_branch
          %166 = sbr.rel (%p164) target = $region16
        $region15: #{mlp_forward.1} parent=11 // pred_region
          %168 = vsyncadd [#allocation3], 0
          %s169 = sshll.u32 %s1, 4
          %s170 = int_to_ptr.hbm [resolvable:$true] %s169
          %s171 = sshll.u32 [#allocation2], 4
          %s172 = int_to_ptr.vmem [resolvable:$true] %s171
          %177 = dma.hbm_to_vmem [thread:$0]  %s170, 1024, %s172, [#allocation3], 64, 64, 4
        $region16: #{mlp_forward.1} parent=11 // pred_fallthru
          _
        // Predicated region
        $region17: #{mlp_forward.1} parent=11 // pred_check
          %p178 = pneg %p81
        $region18: #{mlp_forward.1} parent=11 // pred_check_branch
          %180 = sbr.rel (%p178) target = $region20
        $region19: #{mlp_forward.1} parent=11 // pred_region
          _
        $region20: #{mlp_forward.1} parent=11 // pred_fallthru
          _
        // Predicated region
        $region21: #{mlp_forward.1} parent=11 // pred_check
          %p181 = pneg %p102
        $region22: #{mlp_forward.1} parent=11 // pred_check_branch
          %183 = sbr.rel (%p181) target = $region24
        $region23: #{mlp_forward.1} parent=11 // pred_region
          %185 = vsyncadd [#allocation5], 0
          %s186 = sshll.u32 %s3, 4
          %s187 = int_to_ptr.hbm [resolvable:$true] %s186
          %s188 = sshll.u32 [#allocation4], 4
          %s189 = int_to_ptr.vmem [resolvable:$true] %s188
          %194 = dma.hbm_to_vmem [thread:$0]  %s187, 1024, %s189, [#allocation5], 64, 64, 4
        $region24: #{mlp_forward.1} parent=11 // pred_fallthru
          _
        // Predicated region
        $region25: #{mlp_forward.1} parent=11 // pred_check
          %p195 = pneg %p123
        $region26: #{mlp_forward.1} parent=11 // pred_check_branch
          %197 = sbr.rel (%p195) target = $region28
        $region27: #{mlp_forward.1} parent=11 // pred_region
          _
        $region28: #{mlp_forward.1} parent=11 // pred_fallthru
          _
      $region12: #{mlp_forward.1} parent=5 // pred_fallthru
        _
      %p198 = scmp.lt.s32.totalorder %s13, 2
      // Predicated region
      $region29: #{mlp_forward.1} parent=5 // pred_check
        %p199 = pneg %p198
      $region30: #{mlp_forward.1} parent=5 // pred_check_branch
        %201 = sbr.rel (%p199) target = $region32
      $region31: #{mlp_forward.1} parent=5 // pred_region
        // Predicated region
        $region33: #{mlp_forward.1} parent=31 // pred_check
          %p202 = pneg %p33
        $region34: #{mlp_forward.1} parent=31 // pred_check_branch
          %204 = sbr.rel (%p202) target = $region36
        $region35: #{mlp_forward.1} parent=31 // pred_region
          %p205 = scmp.lt.s32.totalorder %s13, 1
          %s206 = scalar_select %p205, %s13, 1
          %s207 = smul.addr %s206, 4
          %s208 = scalar_lea.vmem %s0, %s207
        $region36: #{mlp_forward.1} parent=31 // pred_fallthru
          _
      $region32: #{mlp_forward.1} parent=5 // pred_fallthru
        _
      %p209 = scmp.le.s32.totalorder 1, %s13
      %p210 = scmp.lt.s32.totalorder %s13, 3
      %p211 = pnand %p209, %p210
      %p212 = pneg %p211
      // Predicated region
      $region37: #{mlp_forward.1} parent=5 // pred_check
        _
      $region38: #{mlp_forward.1} parent=5 // pred_check_branch
        %214 = sbr.rel (%p211) target = $region40
      $region39: #{mlp_forward.1} parent=5 // pred_region
        %s215 = ssub.s32 %s13, 1
        // Predicated region
        $region41: #{mlp_forward.1} parent=39 // pred_check
          %p216 = pneg %p60
        $region42: #{mlp_forward.1} parent=39 // pred_check_branch
          %218 = sbr.rel (%p216) target = $region44
        $region43: #{mlp_forward.1} parent=39 // pred_region
          %220 = dma.done [#allocation3], 1024
        $region44: #{mlp_forward.1} parent=39 // pred_fallthru
          _
        // Predicated region
        $region45: #{mlp_forward.1} parent=39 // pred_check
          %p221 = pneg %p102
        $region46: #{mlp_forward.1} parent=39 // pred_check_branch
          %223 = sbr.rel (%p221) target = $region48
        $region47: #{mlp_forward.1} parent=39 // pred_region
          %225 = dma.done [#allocation5], 1024
        $region48: #{mlp_forward.1} parent=39 // pred_fallthru
          _
        %p226 = scmp.lt.s32.totalorder %s18, 1
        %s227 = scalar_select %p226, %s18, 1
        %s228 = smul.addr %s227, 4
        %s229 = scalar_lea.vmem %s0, %s228
        %p230 = pneg %p39
        %p231 = pneg %p36
        %p232 = pneg %p60
        %p233 = pneg %p57
        %p234 = pneg %p81
        %p235 = pneg %p78
        %p236 = pneg %p102
        %p237 = pneg %p99
        %p238 = pneg %p123
        %p239 = pneg %p120
        %p240 = pneg %p149
        %p241 = pneg %p146
        %p242 = scmp.lt.s32.totalorder %s18, 1
        %s243 = scalar_select %p242, %s18, 1
        %s244 = smul.addr %s243, 8
        %s245 = scalar_lea.vmem %s5, %s244
        %p246 = scmp.lt.s32.totalorder %s18, 1
        %s247 = scalar_select %p246, %s18, 1
        %s248 = smul.addr %s247, 4
        %s249 = scalar_lea.vmem %s0, %s248
        %p250 = scmp.lt.s32.totalorder %s18, 1
        %s251 = scalar_select %p250, %s18, 1
        %s252 = smul.addr %s251, 8
        %s253 = scalar_lea.vmem %s5, %s252
        %v254 = vld [vmem:[%s249] sm:$0xf]
        %v255 = vld [vmem:[#allocation2] sm:$0xf]
        %v256 = vld [vmem:[#allocation2 + $0x4] sm:$0xf]
        %v257 = vld [vmem:[#allocation2 + $0x8] sm:$0xf]
        %v258 = vld [vmem:[#allocation2 + $0xc] sm:$0xf]
        %v259 = vld [vmem:[#allocation2 + $0x10] sm:$0xf]
        %v260 = vld [vmem:[#allocation2 + $0x14] sm:$0xf]
        %v261 = vld [vmem:[#allocation2 + $0x18] sm:$0xf]
        %v262 = vld [vmem:[#allocation2 + $0x1c] sm:$0xf]
        %v263 = vld [vmem:[#allocation2 + $0x20] sm:$0xf]
        %v264 = vld [vmem:[#allocation2 + $0x24] sm:$0xf]
        %v265 = vld [vmem:[#allocation2 + $0x28] sm:$0xf]
        %v266 = vld [vmem:[#allocation2 + $0x2c] sm:$0xf]
        %v267 = vld [vmem:[#allocation2 + $0x30] sm:$0xf]
        %v268 = vld [vmem:[#allocation2 + $0x34] sm:$0xf]
        %v269 = vld [vmem:[#allocation2 + $0x38] sm:$0xf]
        %v270 = vld [vmem:[#allocation2 + $0x3c] sm:$0xf]
        %v271 = vld [vmem:[%s2] sm:$0x1]
        %v273 = vperm.slane %v271, 0
        %v291 = vunpack.c.l.b16 %v255
        %v292 = vunpack.c.l.b16 %v256
        %v293 = vunpack.c.l.b16 %v257
        %v294 = vunpack.c.l.b16 %v258
        %v295 = vunpack.c.l.b16 %v259
        %v296 = vunpack.c.l.b16 %v260
        %v297 = vunpack.c.l.b16 %v261
        %v298 = vunpack.c.l.b16 %v262
        %v299 = vunpack.c.l.b16 %v263
        %v300 = vunpack.c.l.b16 %v264
        %v301 = vunpack.c.l.b16 %v265
        %v302 = vunpack.c.l.b16 %v266
        %v303 = vunpack.c.l.b16 %v267
        %v304 = vunpack.c.l.b16 %v268
        %v305 = vunpack.c.l.b16 %v269
        %v306 = vunpack.c.l.b16 %v270
        %v307 = vpack.c.b16 %v292, %v291
        %v308 = vpack.c.b16 %v294, %v293
        %v309 = vpack.c.b16 %v296, %v295
        %v310 = vpack.c.b16 %v298, %v297
        %v311 = vpack.c.b16 %v300, %v299
        %v312 = vpack.c.b16 %v302, %v301
        %v313 = vpack.c.b16 %v304, %v303
        %v314 = vpack.c.b16 %v306, %v305
        %323 = vmatpush.bf16.msra.mxu0 %v314
        %324 = vmatpush.bf16.msra.mxu0 %v313
        %325 = vmatpush.bf16.msra.mxu0 %v312
        %326 = vmatpush.bf16.msra.mxu0 %v311
        %327 = vmatpush.bf16.msra.mxu0 %v310
        %328 = vmatpush.bf16.msra.mxu0 %v309
        %329 = vmatpush.bf16.msra.mxu0 %v308
        %330 = vmatpush.bf16.msra.mxu0 %v307
        %331 = vmatmul.bf16.gmra.mxu0 %v254
        %v332 = vpop.f32.mrf.mxu0
        %v333 = vadd.f32 %v273, %v332
        %v334 = vpop.f32.mrf.mxu0
        %335 = vdwg.mxu0
        %v336 = vmax.f32 %v333, 0.0
        %v337 = vpack.c.bf16 %v336, %v336
        %v338 = vld [vmem:[#allocation4] sm:$0xf]
        %v339 = vld [vmem:[#allocation4 + $0x4] sm:$0xf]
        %v340 = vld [vmem:[#allocation4 + $0x8] sm:$0xf]
        %v341 = vld [vmem:[#allocation4 + $0xc] sm:$0xf]
        %v342 = vld [vmem:[#allocation4 + $0x10] sm:$0xf]
        %v343 = vld [vmem:[#allocation4 + $0x14] sm:$0xf]
        %v344 = vld [vmem:[#allocation4 + $0x18] sm:$0xf]
        %v345 = vld [vmem:[#allocation4 + $0x1c] sm:$0xf]
        %v346 = vld [vmem:[#allocation4 + $0x20] sm:$0xf]
        %v347 = vld [vmem:[#allocation4 + $0x24] sm:$0xf]
        %v348 = vld [vmem:[#allocation4 + $0x28] sm:$0xf]
        %v349 = vld [vmem:[#allocation4 + $0x2c] sm:$0xf]
        %v350 = vld [vmem:[#allocation4 + $0x30] sm:$0xf]
        %v351 = vld [vmem:[#allocation4 + $0x34] sm:$0xf]
        %v352 = vld [vmem:[#allocation4 + $0x38] sm:$0xf]
        %v353 = vld [vmem:[#allocation4 + $0x3c] sm:$0xf]
        %v354 = vld [vmem:[%s4] sm:$0x1]
        %v356 = vperm.slane %v354, 0
        %v374 = vunpack.c.l.b16 %v338
        %v375 = vunpack.c.l.b16 %v339
        %v376 = vunpack.c.l.b16 %v340
        %v377 = vunpack.c.l.b16 %v341
        %v378 = vunpack.c.l.b16 %v342
        %v379 = vunpack.c.l.b16 %v343
        %v380 = vunpack.c.l.b16 %v344
        %v381 = vunpack.c.l.b16 %v345
        %v382 = vunpack.c.l.b16 %v346
        %v383 = vunpack.c.l.b16 %v347
        %v384 = vunpack.c.l.b16 %v348
        %v385 = vunpack.c.l.b16 %v349
        %v386 = vunpack.c.l.b16 %v350
        %v387 = vunpack.c.l.b16 %v351
        %v388 = vunpack.c.l.b16 %v352
        %v389 = vunpack.c.l.b16 %v353
        %v390 = vpack.c.b16 %v375, %v374
        %v391 = vpack.c.b16 %v377, %v376
        %v392 = vpack.c.b16 %v379, %v378
        %v393 = vpack.c.b16 %v381, %v380
        %v394 = vpack.c.b16 %v383, %v382
        %v395 = vpack.c.b16 %v385, %v384
        %v396 = vpack.c.b16 %v387, %v386
        %v397 = vpack.c.b16 %v389, %v388
        %406 = vmatpush.bf16.msra.mxu0 %v397
        %407 = vmatpush.bf16.msra.mxu0 %v396
        %408 = vmatpush.bf16.msra.mxu0 %v395
        %409 = vmatpush.bf16.msra.mxu0 %v394
        %410 = vmatpush.bf16.msra.mxu0 %v393
        %411 = vmatpush.bf16.msra.mxu0 %v392
        %412 = vmatpush.bf16.msra.mxu0 %v391
        %413 = vmatpush.bf16.msra.mxu0 %v390
        %414 = vmatmul.bf16.gmra.mxu0 %v337
        %v415 = vpop.f32.mrf.mxu0
        %v416 = vadd.f32 %v356, %v415
        %v417 = vpop.f32.mrf.mxu0
        %418 = vdwg.mxu0
        %419 = vst [vmem:[%s253] sm:$0xff] %v416
        %p420 = scmp.lt.s32.totalorder %s18, 1
        %s421 = scalar_select %p420, %s18, 1
        %s422 = smul.addr %s421, 8
        %s423 = scalar_lea.vmem %s5, %s422
        // Predicated region
        $region49: #{mlp_forward.1} parent=39 // pred_check
          %p424 = pneg %p146
        $region50: #{mlp_forward.1} parent=39 // pred_check_branch
          %426 = sbr.rel (%p424) target = $region52
        $region51: #{mlp_forward.1} parent=39 // pred_region
          _
        $region52: #{mlp_forward.1} parent=39 // pred_fallthru
          _
      $region40: #{mlp_forward.1} parent=5 // pred_fallthru
        _
      %p427 = scmp.le.s32.totalorder 2, %s13
      // Predicated region
      $region53: #{mlp_forward.1} parent=5 // pred_check
        %p428 = pneg %p427
      $region54: #{mlp_forward.1} parent=5 // pred_check_branch
        %430 = sbr.rel (%p428) target = $region56
      $region55: #{mlp_forward.1} parent=5 // pred_region
        %s431 = ssub.s32 %s13, 2
        // Predicated region
        $region57: #{mlp_forward.1} parent=55 // pred_check
          %p432 = pneg %p152
        $region58: #{mlp_forward.1} parent=55 // pred_check_branch
          %434 = sbr.rel (%p432) target = $region60
        $region59: #{mlp_forward.1} parent=55 // pred_region
          %p435 = scmp.lt.s32.totalorder %s19, 1
          %s436 = scalar_select %p435, %s19, 1
          %s437 = smul.addr %s436, 8
          %s438 = scalar_lea.vmem %s5, %s437
        $region60: #{mlp_forward.1} parent=55 // pred_fallthru
          _
      $region56: #{mlp_forward.1} parent=5 // pred_fallthru
        _
    $region6: #{mlp_forward.1} parent=1 // loop_footer
      %s17 = sadd.s32 1, %s13
    $region7: #{mlp_forward.1} parent=1 // loop_footer_branch
      %12 = sbr.rel target = $region3
    $region8: #{mlp_forward.1} parent=1 // loop_exit
      _
    %439 = vsyncpa [#allocation3], 1
    %s440 = scalar_lea.sflag [#allocation3], 1
    %441 = vsyncpa %s440, 1
    %442 = vsyncpa [#allocation5], 1

</llo_original>
